<compile_context>
chip_gen: v6e
topology: v6e:2x2x1
jax: 0.10.0
libtpu: 0.0.40
codegen_flags: <defaults>
</compile_context>

<pallas_src>
import functools
import re

import numpy as np
import jax
import jax.numpy as jnp
from jax.experimental import pallas as pl
from jax.experimental.pallas import tpu as pltpu

# ----------------------------- module hyper-params -----------------------------
MAX_DISP = 16            # scaled-down version of the default 320 for small test shapes
LAMBDA_INIT = 1.0
LAMBDA_PROP = 1.0
LAMBDA_SLANT = 1.0
LAMBDA_W = 1.0
ALPHA = 0.9
C_SCALE = 0.1
LOSS_WEIGHT = 1.0
BIG = 1e30               # finite stand-in for +inf (keeps intermediates finite)

PROP_LOSS_WEIGHTS = [1 / 64, 1 / 32, 1 / 32, 1 / 16, 1 / 16, 1 / 8, 1 / 8, 1 / 4, 1 / 4, 1 / 4, 1 / 2, 1.0]
SLANT_LOSS_WEIGHTS = PROP_LOSS_WEIGHTS
W_LOSS_WEIGHTS = [1 / 32, 1 / 32, 1 / 16, 1 / 16, 1 / 8, 1 / 8, 1 / 4, 1 / 4]
PROP_A = [1.0] * 9 + [10000.0] * 3


# ----------------------- generation-aware configuration -----------------------
def _tpu_generation():
    try:
        kind = jax.devices()[0].device_kind.lower()
        m = re.search(r"v(\d+)", kind)
        if m:
            return int(m.group(1))
    except Exception:
        pass
    return 0


def _vmem_capacity_bytes(gen):
    try:
        cap = int(pltpu.get_tpu_info().vmem_capacity_bytes)
        if cap > 0:
            return cap
    except Exception:
        pass
    return (64 << 20) if gen >= 7 else (128 << 20)


_GEN = _tpu_generation()
_VMEM_CAP = _vmem_capacity_bytes(_GEN)
# Review: ~96 MiB scoped limit on v5e/v6e (128 MiB physical), <= 48 MiB on v7x (64 MiB).
_VMEM_LIMIT = min(96 << 20, (3 * _VMEM_CAP) // 4)
_BLOCK_BUDGET = _VMEM_LIMIT // 3            # per-step budget (double-buffered blocks + temps)
# Review: explicitly engage both v7x TensorCores on the leading grid axis.
if _GEN >= 7:
    _ROW_SEM, _RED_SEM = pltpu.CORE_PARALLEL, pltpu.ARBITRARY
else:
    _ROW_SEM, _RED_SEM = "parallel", "arbitrary"
# Review: bf16 transcendentals only where the EUP supports bf16 (v6e/v7x), f32 on v5e.
_USE_BF16_EUP = _GEN >= 6


# -------------------- deterministic plane-fit conv weights (init) --------------------
def _make_plane_fit_weights():
    A = np.zeros((81, 3), dtype=np.float64)
    for i in range(81):
        A[i, 0] = i // 9 - 4
        A[i, 1] = i % 9 - 4
        A[i, 2] = 1.0
    Bmat = np.linalg.inv(A.T @ A) @ A.T          # (3, 81)
    convy_w = Bmat[0].reshape(9, 9)
    convx_w = Bmat[1].reshape(9, 9)
    # A^T A is diagonal -> the 9x9 filters are rank-1 (separable):
    #   convx_w[ky, kx] depends only on kx, convy_w[ky, kx] depends only on ky.
    assert np.allclose(convx_w, np.tile(convx_w[:1, :], (9, 1)))
    assert np.allclose(convy_w, np.tile(convy_w[:, :1], (1, 9)))
    wx1d = convx_w[0, :].astype(np.float32)      # horizontal taps
    wy1d = convy_w[:, 0].astype(np.float32)      # vertical taps
    return wx1d, wy1d


CONVX_1D, CONVY_1D = _make_plane_fit_weights()


def _banded_cols(W, taps):
    """(W+8, W): M[j, w] = taps[j - w] for 0 <= j - w <= 8 (right-multiply matrix)."""
    M = np.zeros((W + 8, W), np.float32)
    for w in range(W):
        M[w:w + 9, w] = taps
    return M


def _banded_rows(H, taps):
    """(H, H+8): M[h, j] = taps[j - h] for 0 <= j - h <= 8 (left-multiply matrix)."""
    M = np.zeros((H, H + 8), np.float32)
    for h in range(H):
        M[h, h:h + 9] = taps
    return M


# ----------------------------- tiling helpers -----------------------------
def _choose_tile_div(n, step, per_unit_bytes, budget):
    """Largest divisor of n that is a multiple of `step` and fits `budget`.
    Falls back to `step` (smallest legal) or to the full extent if n is not step-aligned."""
    if n % step != 0:
        return n
    best = step
    for cand in range(step, n + 1, step):
        if n % cand == 0 and cand * per_unit_bytes <= budget:
            best = cand
    return best


def _choose_d_tile(D, per_d_bytes, budget):
    for td in (32, 16, 8, 4, 2, 1):
        if D % td == 0 and td * per_d_bytes <= budget:
            return td
    return 1


# ----------------------------- plane-fit gradient kernels -----------------------------
def conv_h_kernel(img_ref, wx_ref, box_ref, hx_ref, hbox_ref):
    """Horizontal 9-tap pass as a banded matmul on the MXU (no lane shifts)."""
    b, th, wp = img_ref.shape
    w = hx_ref.shape[-1]
    x = img_ref[...].reshape(b * th, wp)
    hx_ref[...] = jnp.dot(x, wx_ref[...], preferred_element_type=jnp.float32).reshape(b, th, w)
    hbox_ref[...] = jnp.dot(x, box_ref[...], preferred_element_type=jnp.float32).reshape(b, th, w)


def conv_v_kernel(hx_ref, hbox_ref, mbr_ref, mwr_ref, dx_ref, dy_ref):
    """Vertical 9-tap pass as a banded matmul on the MXU (no sublane shifts)."""
    mb = mbr_ref[...]
    mw = mwr_ref[...]
    nb = hx_ref.shape[0]
    for b in range(nb):
        dx_ref[b] = jnp.dot(mb, hx_ref[b], preferred_element_type=jnp.float32)
        dy_ref[b] = jnp.dot(mw, hbox_ref[b], preferred_element_type=jnp.float32)


def plane_grad(dg):
    """dx_gt = convx(d_gt), dy_gt = convy(d_gt): separable 9x9 plane-fit filters.

    dx = BoxRows @ pad @ Wx_cols,  dy = WyRows @ pad @ Box_cols   (all MXU matmuls)
    Pass 1 (horizontal) tiles rows, pass 2 (vertical) tiles columns -> bounded VMEM and
    double-buffered HBM<->VMEM DMA via BlockSpec auto-pipelining.
    """
    Bsz, H, W = dg.shape
    Hp, Wp = H + 8, W + 8
    pad = jnp.pad(dg, ((0, 0), (4, 4), (4, 4)))

    mwx_cols = jnp.asarray(_banded_cols(W, CONVX_1D))            # (Wp, W)
    mbox_cols = jnp.asarray(_banded_cols(W, np.ones(9, np.float32)))
    mbox_rows = jnp.asarray(_banded_rows(H, np.ones(9, np.float32)))   # (H, Hp)
    mwy_rows = jnp.asarray(_banded_rows(H, CONVY_1D))

    # TODO(synk): for very large W/H also tile the banded matrices (2-D grid) instead of
    #             keeping them fully resident.
    # ---- pass 1: horizontal taps, tiled over rows ----
    mat1_bytes = 2 * 2 * Wp * W * 4                               # two matrices, double-buffered
    row_budget = max(_BLOCK_BUDGET - mat1_bytes, 1 << 20)
    per_row = 2 * Bsz * (Wp + 2 * W) * 4
    TH1 = _choose_tile_div(Hp, 8, per_row, row_budget)
    hx, hbox = pl.pallas_call(
        conv_h_kernel,
        grid=(Hp // TH1,),
        in_specs=[pl.BlockSpec((Bsz, TH1, Wp), lambda r: (0, r, 0)),
                  pl.BlockSpec((Wp, W), lambda r: (0, 0)),
                  pl.BlockSpec((Wp, W), lambda r: (0, 0))],
        out_specs=[pl.BlockSpec((Bsz, TH1, W), lambda r: (0, r, 0)),
                   pl.BlockSpec((Bsz, TH1, W), lambda r: (0, r, 0))],
        out_shape=(jax.ShapeDtypeStruct((Bsz, Hp, W), jnp.float32),
                   jax.ShapeDtypeStruct((Bsz, Hp, W), jnp.float32)),
        compiler_params=pltpu.CompilerParams(
            dimension_semantics=(_ROW_SEM,),
            vmem_limit_bytes=_VMEM_LIMIT),
    )(pad, mwx_cols, mbox_cols)

    # ---- pass 2: vertical taps, tiled over columns ----
    mat2_bytes = 2 * 2 * H * Hp * 4
    col_budget = max(_BLOCK_BUDGET - mat2_bytes, 1 << 20)
    per_col = 2 * Bsz * (2 * Hp + 2 * H) * 4
    TW = _choose_tile_div(W, 128, per_col, col_budget)
    dx, dy = pl.pallas_call(
        conv_v_kernel,
        grid=(W // TW,),
        in_specs=[pl.BlockSpec((Bsz, Hp, TW), lambda c: (0, 0, c)),
                  pl.BlockSpec((Bsz, Hp, TW), lambda c: (0, 0, c)),
                  pl.BlockSpec((H, Hp), lambda c: (0, 0)),
                  pl.BlockSpec((H, Hp), lambda c: (0, 0))],
        out_specs=[pl.BlockSpec((Bsz, H, TW), lambda c: (0, 0, c)),
                   pl.BlockSpec((Bsz, H, TW), lambda c: (0, 0, c))],
        out_shape=(jax.ShapeDtypeStruct((Bsz, H, W), jnp.float32),
                   jax.ShapeDtypeStruct((Bsz, H, W), jnp.float32)),
        compiler_params=pltpu.CompilerParams(
            dimension_semantics=(_ROW_SEM,),
            vmem_limit_bytes=_VMEM_LIMIT),
    )(hx, hbox, mbox_rows, mwy_rows)
    return dx, dy


# ----------------------------- init loss -----------------------------
def init_loss_kernel(cv_ref, dg_ref, out_ref, cf_ref, cc_ref, nm_ref, *, TD, level_maxdisp):
    """HITNet eqt (9)-(11).  Grid = (spatial tiles, D chunks); D is the reduction axis."""
    k = pl.program_id(1)

    dg = dg_ref[...]                                    # (B, ST, 128), resident across D chunks
    # torch subpix_cost clamps the pooled GT in-place; the non-match window uses the
    # clamped value, while the validity mask (computed earlier in torch) uses the raw one.
    dgc = jnp.where(dg >= level_maxdisp - 1.0, level_maxdisp - 2.0, dg)
    dgc = jnp.maximum(dgc, 0.0)
    df = jnp.floor(dgc)
    dfi = df.astype(jnp.int32)
    lo = dgc - 1.5
    hi = dgc + 1.5

    @pl.when(k == 0)
    def _init():
        cf_ref[...] = jnp.zeros_like(cf_ref)
        cc_ref[...] = jnp.zeros_like(cc_ref)
        nm_ref[...] = jnp.full_like(nm_ref, BIG)

    cv = cv_ref[...]                                    # (B, TD, ST, 128) current D chunk
    cf = cf_ref[...]
    cc = cc_ref[...]
    nm = nm_ref[...]
    base = k * TD
    for d in range(TD):                                 # static unroll over the chunk
        cvd = cv[:, d]                                  # (B, ST, 128), lane-dense
        d_idx = base + d
        cf = jnp.where(dfi == d_idx, cvd, cf)           # cost at floor(d_gt)
        cc = jnp.where(dfi == d_idx - 1, cvd, cc)       # cost at floor(d_gt) + 1
        d_f = d_idx.astype(jnp.float32)
        non_match = (d_f < lo) | (d_f > hi)
        nm = jnp.where(non_match, jnp.minimum(nm, cvd), nm)
    cf_ref[...] = cf
    cc_ref[...] = cc
    nm_ref[...] = nm

    @pl.when(k == pl.num_programs(1) - 1)
    def _finalize():
        mask = (dg > 0.0) & (dg < level_maxdisp)        # un-clamped GT (torch ordering)
        cost_gt = (dgc - df) * cc + (df + 1.0 - dgc) * cf
        loss = cost_gt + jnp.maximum(1.0 - nm, 0.0)     # beta = 1
        out_ref[0, 0, 0] = jnp.sum(jnp.where(mask, LAMBDA_INIT * loss, 0.0))
        out_ref[0, 0, 1] = jnp.sum(mask.astype(jnp.float32))


def init_loss_level(cv, dg_l, level_maxdisp):
    """One init-loss level: spatial dims flattened to a lane-dense (S, 128) layout
    (padded only when needed), D chunked as the inner grid-reduction axis."""
    Bsz, D, Hs, Ws = cv.shape
    N = Hs * Ws
    NP = ((N + 127) // 128) * 128
    cv_f = cv.reshape(Bsz, D, N)
    dg_f = dg_l.reshape(Bsz, N)
    if NP != N:
        cv_f = jnp.pad(cv_f, ((0, 0), (0, 0), (0, NP - N)))
        dg_f = jnp.pad(dg_f, ((0, 0), (0, NP - N)))     # pad GT with 0 -> masked out
    S = NP // 128
    cv4 = cv_f.reshape(Bsz, D, S, 128)
    dg4 = dg_f.reshape(Bsz, S, 128)

    per_st_bytes = (2 * 8 + 12) * Bsz * 128 * 4         # cv chunk + dg + 3 scratch + temps
    ST = _choose_tile_div(S, 8, per_st_bytes, _BLOCK_BUDGET)
    TD = _choose_d_tile(D, 2 * Bsz * ST * 128 * 4, _BLOCK_BUDGET)
    NS, K = S // ST, D // TD

    kern = functools.partial(init_loss_kernel, TD=TD, level_maxdisp=float(level_maxdisp))
    out = pl.pallas_call(
        kern,
        grid=(NS, K),
        in_specs=[pl.BlockSpec((Bsz, TD, ST, 128), lambda s, k: (0, k, s, 0)),
                  pl.BlockSpec((Bsz, ST, 128), lambda s, k: (0, s, 0))],
        out_specs=pl.BlockSpec((1, 1, 8), lambda s, k: (s, 0, 0)),
        out_shape=jax.ShapeDtypeStruct((NS, 1, 8), jnp.float32),
        scratch_shapes=[pltpu.VMEM((Bsz, ST, 128), jnp.float32) for _ in range(3)],
        compiler_params=pltpu.CompilerParams(
            dimension_semantics=(_ROW_SEM, _RED_SEM),
            vmem_limit_bytes=_VMEM_LIMIT),
    )(cv4, dg4)
    return out[:, 0, 0].sum(), out[:, 0, 1].sum()


# ----------------------------- fused prop / slant / w losses -----------------------------
def fused_psw_kernel(*refs, n_prop, n_dx, n_w, use_bf16_exp):
    """One row tile: statically unrolled loop over pyramid levels.

    Inactive slant/w levels are skipped at trace time (zero runtime cost).  Per-level
    contributions are accumulated elementwise (VALU); only 6 cross-lane reductions and
    one tiny packed output block per row tile.
    """
    dgt_ref, dxg_ref, dyg_ref = refs[0], refs[1], refs[2]
    disp_refs = refs[3:3 + n_prop]
    dx_refs = refs[3 + n_prop:3 + n_prop + n_dx]
    dy_refs = refs[3 + n_prop + n_dx:3 + n_prop + 2 * n_dx]
    w_refs = refs[3 + n_prop + 2 * n_dx:3 + n_prop + 2 * n_dx + n_w]
    out_ref = refs[3 + n_prop + 2 * n_dx + n_w]

    dgt = dgt_ref[...]                                  # full-res GT tile
    # computed ONCE per row tile and shared by every level / sub-loss
    valid = ((dgt > 0.0) & (dgt < float(MAX_DISP))).astype(jnp.float32)
    # TODO(synk): compute_valid_mask(meta, ...) is an external helper; approximated as
    #             (d_gt > 0) & (d_gt < max_disp); `meta` is unused.

    am2 = abs(ALPHA - 2.0)
    inv_c2_am2 = 1.0 / (C_SCALE * C_SCALE * am2)
    echo_coef = am2 / ALPHA
    half_alpha = ALPHA * 0.5

    zeros = jnp.zeros_like(dgt)
    prop_acc = zeros
    slant_acc = zeros
    slant_cnt = zeros
    w_acc = zeros
    w_cnt = zeros

    dxg = dxg_ref[...] if n_dx > 0 else None
    dyg = dyg_ref[...] if n_dx > 0 else None

    for l in range(n_prop):
        diff = jnp.abs(dgt - disp_refs[l][...])         # shared by the three sub-losses

        # ---- prop loss, HITNet eqt (12): robust "echo" loss on truncated |d_gt - d^| ----
        x = jnp.minimum(diff, PROP_A[l])
        base = x * x * inv_c2_am2 + 1.0
        if use_bf16_exp:
            # bf16 EUP (v6e/v7x): ~2x transcendental throughput, ~1e-3-level loss error.
            p = jnp.exp(half_alpha * jnp.log(base.astype(jnp.bfloat16))).astype(jnp.float32)
        else:
            p = jnp.exp(half_alpha * jnp.log(base))
        prop_acc = prop_acc + (LAMBDA_PROP * PROP_LOSS_WEIGHTS[l] * echo_coef) * (p - 1.0)

        do_slant = l < n_dx
        do_w = 1 <= l <= n_w                            # w level i pairs with prop level i+1
        if do_slant or do_w:
            closer = (diff < 1.0).astype(jnp.float32)   # B = 1 (== C1)

        # ---- slant loss: L1 on plane-fit gradients where |d_gt - d^| < 1 ----
        if do_slant:
            l1 = jnp.abs(dxg - dx_refs[l][...]) + jnp.abs(dyg - dy_refs[l][...])
            slant_acc = slant_acc + SLANT_LOSS_WEIGHTS[l] * closer * l1
            slant_cnt = slant_cnt + closer

        # ---- w (confidence) loss ----
        if do_w:
            wi = l - 1
            further = (diff > 1.5).astype(jnp.float32)  # C2 = 1.5
            conf = w_refs[wi][...]
            w_val = jnp.maximum(1.0 - conf, 0.0) * closer + jnp.maximum(conf, 0.0) * further
            w_acc = w_acc + W_LOSS_WEIGHTS[wi] * w_val
            w_cnt = w_cnt + jnp.maximum(closer, further)

    valid_sum = jnp.sum(valid)
    out_ref[0, 0, 0] = jnp.sum(valid * prop_acc)
    out_ref[0, 0, 1] = float(n_prop) * valid_sum
    out_ref[0, 0, 2] = LAMBDA_SLANT * jnp.sum(valid * slant_acc)
    out_ref[0, 0, 3] = jnp.sum(valid * slant_cnt)
    out_ref[0, 0, 4] = LAMBDA_W * jnp.sum(valid * w_acc)
    out_ref[0, 0, 5] = jnp.sum(valid * w_cnt)
    out_ref[0, 0, 6] = jnp.float32(0.0)
    out_ref[0, 0, 7] = jnp.float32(0.0)


def fused_psw_losses(dg, dx_gt, dy_gt, prop_disp_pyr, dx_pyr, dy_pyr, w_pyr):
    """Single launch over row tiles computing the category totals (sum, count) for the
    prop, slant and w losses.  Reads the per-level pyramid buffers directly (no stacking)."""
    Bsz, H, W = dg.shape
    n_prop, n_dx, n_w = len(prop_disp_pyr), len(dx_pyr), len(w_pyr)

    disp = [p[:, 0] for p in prop_disp_pyr]             # free channel squeeze
    dxs = [p[:, 0] for p in dx_pyr]
    dys = [p[:, 0] for p in dy_pyr]
    ws = [p[:, 0] for p in w_pyr]

    n_maps = 3 + n_prop + 2 * n_dx + n_w
    # double-buffered input blocks + ~10 live full-tile f32 temporaries/accumulators
    per_row_bytes = (2 * n_maps + 10) * Bsz * W * 4
    TH = _choose_tile_div(H, 8, per_row_bytes, _BLOCK_BUDGET)
    R = H // TH

    tile_spec = pl.BlockSpec((Bsz, TH, W), lambda r: (0, r, 0))
    kern = functools.partial(fused_psw_kernel, n_prop=n_prop, n_dx=n_dx, n_w=n_w,
                             use_bf16_exp=_USE_BF16_EUP)
    out = pl.pallas_call(
        kern,
        grid=(R,),
        in_specs=[tile_spec] * n_maps,
        out_specs=pl.BlockSpec((1, 1, 8), lambda r: (r, 0, 0)),
        out_shape=jax.ShapeDtypeStruct((R, 1, 8), jnp.float32),
        compiler_params=pltpu.CompilerParams(
            dimension_semantics=(_ROW_SEM,),
            vmem_limit_bytes=_VMEM_LIMIT),
    )(dg, dx_gt, dy_gt, *disp, *dxs, *dys, *ws)
    return out[:, 0, :].sum(axis=0)                      # (8,) category totals


# ----------------------------- top-level loss -----------------------------
def hit_loss(init_cv_cost_pyramid, prop_disp_pyramid, dx_pyramid, dy_pyramid, w_pyramid, d_gt):
    dg = d_gt[:, 0]                                     # (B, H, W)
    Bsz, H, W = dg.shape

    dx_gt, dy_gt = plane_grad(dg)

    # d_gt pyramid via progressive max-pool (4x once, then repeated 2x; plain-JAX glue)
    L_init = len(init_cv_cost_pyramid)
    pooled = dg.reshape(Bsz, H // 4, 4, W // 4, 4).max(axis=(2, 4))
    raw_pools = [pooled]
    for _ in range(1, L_init):
        ph, pw = pooled.shape[1], pooled.shape[2]
        pooled = pooled.reshape(Bsz, ph // 2, 2, pw // 2, 2).max(axis=(2, 4))
        raw_pools.append(pooled)
    d_gt_pyr = [raw_pools[i] / float(2 ** i) for i in range(L_init)][::-1]

    # init loss: one call per level (shapes differ), D chunked as a reduction axis
    # TODO(synk): the few per-level init calls could be batched if levels shared shapes.
    init_sum = jnp.float32(0.0)
    init_cnt = jnp.float32(0.0)
    for i, cv in enumerate(init_cv_cost_pyramid):
        level_maxdisp = MAX_DISP / 2 ** (L_init - 1 - i)
        s, c = init_loss_level(cv, d_gt_pyr[i], level_maxdisp)
        init_sum, init_cnt = init_sum + s, init_cnt + c

    # prop + slant + w losses: single fused, row-tiled launch reading per-level buffers
    totals = fused_psw_losses(dg, dx_gt, dy_gt, prop_disp_pyramid,
                              dx_pyramid, dy_pyramid, w_pyramid)
    prop_sum, prop_cnt = totals[0], totals[1]
    slant_sum, slant_cnt = totals[2], totals[3]
    w_sum, w_cnt = totals[4], totals[5]

    def _safe_mean(s, c):
        return s / jnp.maximum(c, 1.0)                  # guard empty masks (torch would NaN)

    losses = {
        "init_loss": _safe_mean(init_sum, init_cnt),
        "prop_loss": _safe_mean(prop_sum, prop_cnt),
        "slant_loss": _safe_mean(slant_sum, slant_cnt),
        "w_loss": _safe_mean(w_sum, w_cnt),
    }
    total = _safe_mean(init_sum + prop_sum + slant_sum + w_sum,
                       init_cnt + prop_cnt + slant_cnt + w_cnt)
    return LOSS_WEIGHT * total, losses


# ----------------------------- demo -----------------------------
if __name__ == "__main__":
    key = jax.random.PRNGKey(0)
    keys = jax.random.split(key, 16)
    Bsz, H, W = 2, 32, 32

    d_gt = jax.random.uniform(keys[0], (Bsz, 1, H, W), jnp.float32, 0.5, MAX_DISP - 2.0)

    # 2-level init cost pyramid: coarse (D=8, 4x4) then fine (D=16, 8x8)
    init_cv = [
        jax.random.uniform(keys[1], (Bsz, 8, 4, 4), jnp.float32, 0.0, 2.0),
        jax.random.uniform(keys[2], (Bsz, 16, 8, 8), jnp.float32, 0.0, 2.0),
    ]
    n_prop = 3
    prop_disp = [d_gt + 0.5 * jax.random.normal(keys[3 + i], d_gt.shape, jnp.float32)
                 for i in range(n_prop)]
    dx_pyr = [0.1 * jax.random.normal(keys[6 + i], d_gt.shape, jnp.float32) for i in range(n_prop)]
    dy_pyr = [0.1 * jax.random.normal(keys[9 + i], d_gt.shape, jnp.float32) for i in range(n_prop)]
    w_pyr = [jax.random.uniform(keys[12 + i], d_gt.shape, jnp.float32) for i in range(2)]

    total, losses = hit_loss(init_cv, prop_disp, dx_pyr, dy_pyr, w_pyr, d_gt)
    jax.block_until_ready(total)
    for v in losses.values():
        jax.block_until_ready(v)
    print("KERNEL_OK")
</pallas_src>

<mosaic_0001>
module attributes {stable_mosaic.version = 11 : i64} {
  func.func @conv_h_kernel(%arg0: i32, %arg1: memref<2x40x40xf32, #tpu.memory_space<vmem>>, %arg2: memref<40x32xf32, #tpu.memory_space<vmem>>, %arg3: memref<40x32xf32, #tpu.memory_space<vmem>>, %arg4: memref<2x40x32xf32, #tpu.memory_space<vmem>>, %arg5: memref<2x40x32xf32, #tpu.memory_space<vmem>>) attributes {dimension_semantics = [#tpu.dimension_semantics<parallel>], iteration_bounds = array<i64: 1>, scalar_prefetch = 0 : i64, scratch_operands = 0 : i64, tpu.core_type = #tpu.core_type<tc>, window_params = [{transform_indices = @transform_0, window_bounds = array<i64: 2, 40, 40>}, {pipeline_mode = #tpu.pipeline_mode<synchronous>, transform_indices = @transform_1, window_bounds = array<i64: 40, 32>}, {pipeline_mode = #tpu.pipeline_mode<synchronous>, transform_indices = @transform_2, window_bounds = array<i64: 40, 32>}, {transform_indices = @transform_3, window_bounds = array<i64: 2, 40, 32>}, {transform_indices = @transform_4, window_bounds = array<i64: 2, 40, 32>}]} {
    %c0 = arith.constant 0 : index
    %c0_0 = arith.constant 0 : index
    %c0_1 = arith.constant 0 : index
    %0 = vector.load %arg1[%c0, %c0_0, %c0_1] : memref<2x40x40xf32, #tpu.memory_space<vmem>>, vector<2x40x40xf32>
    %1 = vector.shape_cast %0 : vector<2x40x40xf32> to vector<80x40xf32>
    %c0_2 = arith.constant 0 : index
    %c0_3 = arith.constant 0 : index
    %2 = vector.load %arg2[%c0_2, %c0_3] : memref<40x32xf32, #tpu.memory_space<vmem>>, vector<40x32xf32>
    %cst = arith.constant dense<0.000000e+00> : vector<80x32xf32>
    %3 = tpu.matmul %1, %2, %cst {dimension_numbers = #tpu.dot_dimension_numbers<[1], [0], [0], [1], [0, 0, 1, 1], [], []>} : vector<80x40xf32>, vector<40x32xf32>, vector<80x32xf32> -> vector<80x32xf32>
    %4 = vector.shape_cast %3 : vector<80x32xf32> to vector<2x40x32xf32>
    %c0_4 = arith.constant 0 : index
    %c0_5 = arith.constant 0 : index
    %c0_6 = arith.constant 0 : index
    %5 = vector.load %arg4[%c0_4, %c0_5, %c0_6] : memref<2x40x32xf32, #tpu.memory_space<vmem>>, vector<2x40x32xf32>
    tpu.vector_store %arg4[%c0_4, %c0_5, %c0_6], %4 {strides = array<i32>} : memref<2x40x32xf32, #tpu.memory_space<vmem>>, vector<2x40x32xf32>,
    %c0_7 = arith.constant 0 : index
    %c0_8 = arith.constant 0 : index
    %6 = vector.load %arg3[%c0_7, %c0_8] : memref<40x32xf32, #tpu.memory_space<vmem>>, vector<40x32xf32>
    %cst_9 = arith.constant dense<0.000000e+00> : vector<80x32xf32>
    %7 = tpu.matmul %1, %6, %cst_9 {dimension_numbers = #tpu.dot_dimension_numbers<[1], [0], [0], [1], [0, 0, 1, 1], [], []>} : vector<80x40xf32>, vector<40x32xf32>, vector<80x32xf32> -> vector<80x32xf32>
    %8 = vector.shape_cast %7 : vector<80x32xf32> to vector<2x40x32xf32>
    %c0_10 = arith.constant 0 : index
    %c0_11 = arith.constant 0 : index
    %c0_12 = arith.constant 0 : index
    %9 = vector.load %arg5[%c0_10, %c0_11, %c0_12] : memref<2x40x32xf32, #tpu.memory_space<vmem>>, vector<2x40x32xf32>
    tpu.vector_store %arg5[%c0_10, %c0_11, %c0_12], %8 {strides = array<i32>} : memref<2x40x32xf32, #tpu.memory_space<vmem>>, vector<2x40x32xf32>,
    return
  }
  func.func @transform_0(%arg0: i32) -> (i32, i32, i32) {
    %c0_i32 = arith.constant 0 : i32
    %c0_i32_0 = arith.constant 0 : i32
    %c0_i32_1 = arith.constant 0 : i32
    return %c0_i32, %arg0, %c0_i32_0 : i32, i32, i32
  }
  func.func @transform_1(%arg0: i32) -> (i32, i32) {
    %c0_i32 = arith.constant 0 : i32
    %c0_i32_0 = arith.constant 0 : i32
    %c0_i32_1 = arith.constant 0 : i32
    return %c0_i32, %c0_i32_0 : i32, i32
  }
  func.func @transform_2(%arg0: i32) -> (i32, i32) {
    %c0_i32 = arith.constant 0 : i32
    %c0_i32_0 = arith.constant 0 : i32
    %c0_i32_1 = arith.constant 0 : i32
    return %c0_i32, %c0_i32_0 : i32, i32
  }
  func.func @transform_3(%arg0: i32) -> (i32, i32, i32) {
    %c0_i32 = arith.constant 0 : i32
    %c0_i32_0 = arith.constant 0 : i32
    %c0_i32_1 = arith.constant 0 : i32
    return %c0_i32, %arg0, %c0_i32_0 : i32, i32, i32
  }
  func.func @transform_4(%arg0: i32) -> (i32, i32, i32) {
    %c0_i32 = arith.constant 0 : i32
    %c0_i32_0 = arith.constant 0 : i32
    %c0_i32_1 = arith.constant 0 : i32
    return %c0_i32, %arg0, %c0_i32_0 : i32, i32, i32
  }
}

</mosaic_0001>

<llo_original>
// kernel: tpu_custom_call.1
$region0: #{tpu_custom_call.1}
  #allocation0 [shape = 'u32[]', space=smem, size = 0x4, offset = 0x4, fixed_abs, tag = 'smem constant byte address 0x4 - core index']
  #allocation1 [shape = 'u32[144,128]{1,0:T(1,128)}', space=vmem, size = 0x12000, scoped, tag = 'internal scratch']
  %s0 = inlined_call_operand.vmem [shape: f32[2,40,40], index: 0, kind: input, shape index: {}]
  %s1 = inlined_call_operand.vmem [shape: f32[40,32], index: 1, kind: input, shape index: {}]
  %s2 = inlined_call_operand.vmem [shape: f32[40,32], index: 2, kind: input, shape index: {}]
  %s3 = inlined_call_operand.vmem [shape: f32[2,40,32], index: 3, kind: output, shape index: {0}]
  %s4 = inlined_call_operand.vmem [shape: f32[2,40,32], index: 4, kind: output, shape index: {1}]
  %5 = xla_tuple %s3, %s4
  %s6 = sld [smem:[#allocation0]]
  $region30: #{tpu_custom_call.1} parent=0
    _
  %s8 = ssub.s32 1, %s6
  %s9 = scalar_select 0, %s8, %s6
  // Predicated region
  $region2: #{tpu_custom_call.1} parent=0 // pred_check
    _
  $region3: #{tpu_custom_call.1} parent=0 // pred_check_branch
    %11 = sbr.rel (0) target = $region5
  $region4: #{tpu_custom_call.1} parent=0 // pred_region
    _
  $region5: #{tpu_custom_call.1} parent=0 // pred_fallthru
    _
  // Predicated region
  $region6: #{tpu_custom_call.1} parent=0 // pred_check
    _
  $region7: #{tpu_custom_call.1} parent=0 // pred_check_branch
    %13 = sbr.rel (0) target = $region9
  $region8: #{tpu_custom_call.1} parent=0 // pred_region
    _
  $region9: #{tpu_custom_call.1} parent=0 // pred_fallthru
    _
  // Predicated region
  $region10: #{tpu_custom_call.1} parent=0 // pred_check
    _
  $region11: #{tpu_custom_call.1} parent=0 // pred_check_branch
    %15 = sbr.rel (0) target = $region13
  $region12: #{tpu_custom_call.1} parent=0 // pred_region
    _
  $region13: #{tpu_custom_call.1} parent=0 // pred_fallthru
    _
  %v16 = vld [vmem:[%s0] sm:$0xff]
  %v17 = vld [vmem:[%s0 + $0x8] sm:$0xff]
  %v18 = vld [vmem:[%s0 + $0x10] sm:$0xff]
  %v19 = vld [vmem:[%s0 + $0x18] sm:$0xff]
  %v20 = vld [vmem:[%s0 + $0x20] sm:$0xff]
  %v21 = vld [vmem:[%s0 + $0x28] sm:$0xff]
  %v22 = vld [vmem:[%s0 + $0x30] sm:$0xff]
  %v23 = vld [vmem:[%s0 + $0x38] sm:$0xff]
  %v24 = vld [vmem:[%s0 + $0x40] sm:$0xff]
  %v25 = vld [vmem:[%s0 + $0x48] sm:$0xff]
  %v26 = vld [vmem:[%s1] sm:$0xff]
  %v27 = vld [vmem:[%s1 + $0x8] sm:$0xff]
  %v28 = vld [vmem:[%s1 + $0x10] sm:$0xff]
  %v29 = vld [vmem:[%s1 + $0x18] sm:$0xff]
  %v30 = vld [vmem:[%s1 + $0x20] sm:$0xff]
  %vm31 = vcmask 326656
  %v33 = vsel %vm31, %v16, 0
  %v36 = vsel %vm31, %v17, 0
  %v39 = vsel %vm31, %v18, 0
  %v42 = vsel %vm31, %v19, 0
  %v45 = vsel %vm31, %v20, 0
  %v48 = vsel %vm31, %v21, 0
  %v51 = vsel %vm31, %v22, 0
  %v54 = vsel %vm31, %v23, 0
  %v57 = vsel %vm31, %v24, 0
  %v60 = vsel %vm31, %v25, 0
  %62 = vmatprep.subr.mxu0 0.0
  %63 = vmatpush1.msra.mxu0 0.0
  %64 = vmatprep.subr.mxu0 0.0
  %65 = vmatpush1.msra.mxu0 0.0
  %66 = vmatprep.subr.mxu0 0.0
  %67 = vmatpush1.msra.mxu0 0.0
  %68 = vmatprep.subr.mxu0 0.0
  %69 = vmatpush1.msra.mxu0 0.0
  %70 = vmatprep.subr.mxu0 0.0
  %71 = vmatpush1.msra.mxu0 0.0
  %72 = vmatprep.subr.mxu0 0.0
  %73 = vmatpush1.msra.mxu0 0.0
  %74 = vmatprep.subr.mxu0 0.0
  %75 = vmatpush1.msra.mxu0 0.0
  %76 = vmatprep.subr.mxu0 0.0
  %77 = vmatpush1.msra.mxu0 0.0
  %78 = vmatprep.subr.mxu0 0.0
  %79 = vmatpush1.msra.mxu0 0.0
  %80 = vmatprep.subr.mxu0 0.0
  %81 = vmatpush1.msra.mxu0 0.0
  %82 = vmatprep.subr.mxu0 0.0
  %83 = vmatpush1.msra.mxu0 0.0
  %84 = vmatprep.subr.mxu0 0.0
  %85 = vmatpush1.msra.mxu0 %v30
  %86 = vmatprep.subr.mxu0 0.0
  %87 = vmatpush1.msra.mxu0 %v29
  %88 = vmatprep.subr.mxu0 0.0
  %89 = vmatpush1.msra.mxu0 %v28
  %90 = vmatprep.subr.mxu0 0.0
  %91 = vmatpush1.msra.mxu0 %v27
  %92 = vmatprep.subr.mxu0 0.0
  %93 = vmatpush1.msra.mxu0 %v26
  %94 = vmatprep.subr.mxu0 0.0
  %95 = vmatpush2.msra.mxu0 0.0
  %96 = vmatprep.subr.mxu0 0.0
  %97 = vmatpush2.msra.mxu0 0.0
  %98 = vmatprep.subr.mxu0 0.0
  %99 = vmatpush2.msra.mxu0 0.0
  %100 = vmatprep.subr.mxu0 0.0
  %101 = vmatpush2.msra.mxu0 0.0
  %102 = vmatprep.subr.mxu0 0.0
  %103 = vmatpush2.msra.mxu0 0.0
  %104 = vmatprep.subr.mxu0 0.0
  %105 = vmatpush2.msra.mxu0 0.0
  %106 = vmatprep.subr.mxu0 0.0
  %107 = vmatpush2.msra.mxu0 0.0
  %108 = vmatprep.subr.mxu0 0.0
  %109 = vmatpush2.msra.mxu0 0.0
  %110 = vmatprep.subr.mxu0 0.0
  %111 = vmatpush2.msra.mxu0 0.0
  %112 = vmatprep.subr.mxu0 0.0
  %113 = vmatpush2.msra.mxu0 0.0
  %114 = vmatprep.subr.mxu0 0.0
  %115 = vmatpush2.msra.mxu0 0.0
  %116 = vmatprep.subr.mxu0 0.0
  %117 = vmatpush2.msra.mxu0 0.0
  %118 = vmatprep.subr.mxu0 0.0
  %119 = vmatpush2.msra.mxu0 0.0
  %120 = vmatprep.subr.mxu0 0.0
  %121 = vmatpush2.msra.mxu0 0.0
  %122 = vmatprep.subr.mxu0 0.0
  %123 = vmatpush2.msra.mxu0 0.0
  %124 = vmatprep.subr.mxu0 0.0
  %125 = vmatpush2.msra.mxu0 0.0
  %126 = vmatprep.mubr.f32.mxu0 0.0
  %127 = vmatmul.mubr.f32.gmra.mxu0 %v33
  %v128 = vpop.f32.mrf.mxu0
  %v129 = vadd.f32 0.0, %v128
  %v130 = vpop.f32.mrf.mxu0
  %131 = vmatprep.mubr.f32.mxu0 0.0
  %132 = vmatmul.mubr.f32.gmra.mxu0 %v36
  %v133 = vpop.f32.mrf.mxu0
  %v134 = vadd.f32 0.0, %v133
  %v135 = vpop.f32.mrf.mxu0
  %136 = vmatprep.mubr.f32.mxu0 0.0
  %137 = vmatmul.mubr.f32.gmra.mxu0 %v39
  %v138 = vpop.f32.mrf.mxu0
  %v139 = vadd.f32 0.0, %v138
  %v140 = vpop.f32.mrf.mxu0
  %141 = vmatprep.mubr.f32.mxu0 0.0
  %142 = vmatmul.mubr.f32.gmra.mxu0 %v42
  %v143 = vpop.f32.mrf.mxu0
  %v144 = vadd.f32 0.0, %v143
  %v145 = vpop.f32.mrf.mxu0
  %146 = vmatprep.mubr.f32.mxu0 0.0
  %147 = vmatmul.mubr.f32.gmra.mxu0 %v45
  %v148 = vpop.f32.mrf.mxu0
  %v149 = vadd.f32 0.0, %v148
  %v150 = vpop.f32.mrf.mxu0
  %151 = vmatprep.mubr.f32.mxu0 0.0
  %152 = vmatmul.mubr.f32.gmra.mxu0 %v48
  %v153 = vpop.f32.mrf.mxu0
  %v154 = vadd.f32 0.0, %v153
  %v155 = vpop.f32.mrf.mxu0
  %156 = vmatprep.mubr.f32.mxu0 0.0
  %157 = vmatmul.mubr.f32.gmra.mxu0 %v51
  %v158 = vpop.f32.mrf.mxu0
  %v159 = vadd.f32 0.0, %v158
  %v160 = vpop.f32.mrf.mxu0
  %161 = vmatprep.mubr.f32.mxu0 0.0
  %162 = vmatmul.mubr.f32.gmra.mxu0 %v54
  %v163 = vpop.f32.mrf.mxu0
  %v164 = vadd.f32 0.0, %v163
  %v165 = vpop.f32.mrf.mxu0
  %166 = vmatprep.mubr.f32.mxu0 0.0
  %167 = vmatmul.mubr.f32.gmra.mxu0 %v57
  %v168 = vpop.f32.mrf.mxu0
  %v169 = vadd.f32 0.0, %v168
  %v170 = vpop.f32.mrf.mxu0
  %171 = vmatprep.mubr.f32.mxu0 0.0
  %172 = vmatmul.mubr.f32.gmra.mxu0 %v60
  %v173 = vpop.f32.mrf.mxu0
  %v174 = vadd.f32 0.0, %v173
  %v175 = vpop.f32.mrf.mxu0
  %176 = vdwg.mxu0
  %vm177 = vcmask 261120
  %178 = vst.msk [vmem:[%s3] sm:$0xff] %vm177, %v129
  %179 = vst.msk [vmem:[%s3 + $0x8] sm:$0xff] %vm177, %v134
  %180 = vst.msk [vmem:[%s3 + $0x10] sm:$0xff] %vm177, %v139
  %181 = vst.msk [vmem:[%s3 + $0x18] sm:$0xff] %vm177, %v144
  %182 = vst.msk [vmem:[%s3 + $0x20] sm:$0xff] %vm177, %v149
  %183 = vst.msk [vmem:[%s3 + $0x28] sm:$0xff] %vm177, %v154
  %184 = vst.msk [vmem:[%s3 + $0x30] sm:$0xff] %vm177, %v159
  %185 = vst.msk [vmem:[%s3 + $0x38] sm:$0xff] %vm177, %v164
  %186 = vst.msk [vmem:[%s3 + $0x40] sm:$0xff] %vm177, %v169
  %187 = vst.msk [vmem:[%s3 + $0x48] sm:$0xff] %vm177, %v174
  %v188 = vld [vmem:[%s2] sm:$0xff]
  %v189 = vld [vmem:[%s2 + $0x8] sm:$0xff]
  %v190 = vld [vmem:[%s2 + $0x10] sm:$0xff]
  %v191 = vld [vmem:[%s2 + $0x18] sm:$0xff]
  %v192 = vld [vmem:[%s2 + $0x20] sm:$0xff]
  %193 = vmatprep.subr.mxu0 0.0
  %194 = vmatpush1.msra.mxu0 0.0
  %195 = vmatprep.subr.mxu0 0.0
  %196 = vmatpush1.msra.mxu0 0.0
  %197 = vmatprep.subr.mxu0 0.0
  %198 = vmatpush1.msra.mxu0 0.0
  %199 = vmatprep.subr.mxu0 0.0
  %200 = vmatpush1.msra.mxu0 0.0
  %201 = vmatprep.subr.mxu0 0.0
  %202 = vmatpush1.msra.mxu0 0.0
  %203 = vmatprep.subr.mxu0 0.0
  %204 = vmatpush1.msra.mxu0 0.0
  %205 = vmatprep.subr.mxu0 0.0
  %206 = vmatpush1.msra.mxu0 0.0
  %207 = vmatprep.subr.mxu0 0.0
  %208 = vmatpush1.msra.mxu0 0.0
  %209 = vmatprep.subr.mxu0 0.0
  %210 = vmatpush1.msra.mxu0 0.0
  %211 = vmatprep.subr.mxu0 0.0
  %212 = vmatpush1.msra.mxu0 0.0
  %213 = vmatprep.subr.mxu0 0.0
  %214 = vmatpush1.msra.mxu0 0.0
  %215 = vmatprep.subr.mxu0 0.0
  %216 = vmatpush1.msra.mxu0 %v192
  %217 = vmatprep.subr.mxu0 0.0
  %218 = vmatpush1.msra.mxu0 %v191
  %219 = vmatprep.subr.mxu0 0.0
  %220 = vmatpush1.msra.mxu0 %v190
  %221 = vmatprep.subr.mxu0 0.0
  %222 = vmatpush1.msra.mxu0 %v189
  %223 = vmatprep.subr.mxu0 0.0
  %224 = vmatpush1.msra.mxu0 %v188
  %225 = vmatprep.subr.mxu0 0.0
  %226 = vmatpush2.msra.mxu0 0.0
  %227 = vmatprep.subr.mxu0 0.0
  %228 = vmatpush2.msra.mxu0 0.0
  %229 = vmatprep.subr.mxu0 0.0
  %230 = vmatpush2.msra.mxu0 0.0
  %231 = vmatprep.subr.mxu0 0.0
  %232 = vmatpush2.msra.mxu0 0.0
  %233 = vmatprep.subr.mxu0 0.0
  %234 = vmatpush2.msra.mxu0 0.0
  %235 = vmatprep.subr.mxu0 0.0
  %236 = vmatpush2.msra.mxu0 0.0
  %237 = vmatprep.subr.mxu0 0.0
  %238 = vmatpush2.msra.mxu0 0.0
  %239 = vmatprep.subr.mxu0 0.0
  %240 = vmatpush2.msra.mxu0 0.0
  %241 = vmatprep.subr.mxu0 0.0
  %242 = vmatpush2.msra.mxu0 0.0
  %243 = vmatprep.subr.mxu0 0.0
  %244 = vmatpush2.msra.mxu0 0.0
  %245 = vmatprep.subr.mxu0 0.0
  %246 = vmatpush2.msra.mxu0 0.0
  %247 = vmatprep.subr.mxu0 0.0
  %248 = vmatpush2.msra.mxu0 0.0
  %249 = vmatprep.subr.mxu0 0.0
  %250 = vmatpush2.msra.mxu0 0.0
  %251 = vmatprep.subr.mxu0 0.0
  %252 = vmatpush2.msra.mxu0 0.0
  %253 = vmatprep.subr.mxu0 0.0
  %254 = vmatpush2.msra.mxu0 0.0
  %255 = vmatprep.subr.mxu0 0.0
  %256 = vmatpush2.msra.mxu0 0.0
  %257 = vmatprep.mubr.f32.mxu0 0.0
  %258 = vmatmul.mubr.f32.gmra.mxu0 %v33
  %v259 = vpop.f32.mrf.mxu0
  %v260 = vadd.f32 0.0, %v259
  %v261 = vpop.f32.mrf.mxu0
  %262 = vmatprep.mubr.f32.mxu0 0.0
  %263 = vmatmul.mubr.f32.gmra.mxu0 %v36
  %v264 = vpop.f32.mrf.mxu0
  %v265 = vadd.f32 0.0, %v264
  %v266 = vpop.f32.mrf.mxu0
  %267 = vmatprep.mubr.f32.mxu0 0.0
  %268 = vmatmul.mubr.f32.gmra.mxu0 %v39
  %v269 = vpop.f32.mrf.mxu0
  %v270 = vadd.f32 0.0, %v269
  %v271 = vpop.f32.mrf.mxu0
  %272 = vmatprep.mubr.f32.mxu0 0.0
  %273 = vmatmul.mubr.f32.gmra.mxu0 %v42
  %v274 = vpop.f32.mrf.mxu0
  %v275 = vadd.f32 0.0, %v274
  %v276 = vpop.f32.mrf.mxu0
  %277 = vmatprep.mubr.f32.mxu0 0.0
  %278 = vmatmul.mubr.f32.gmra.mxu0 %v45
  %v279 = vpop.f32.mrf.mxu0
  %v280 = vadd.f32 0.0, %v279
  %v281 = vpop.f32.mrf.mxu0
  %282 = vmatprep.mubr.f32.mxu0 0.0
  %283 = vmatmul.mubr.f32.gmra.mxu0 %v48
  %v284 = vpop.f32.mrf.mxu0
  %v285 = vadd.f32 0.0, %v284
  %v286 = vpop.f32.mrf.mxu0
  %287 = vmatprep.mubr.f32.mxu0 0.0
  %288 = vmatmul.mubr.f32.gmra.mxu0 %v51
  %v289 = vpop.f32.mrf.mxu0
  %v290 = vadd.f32 0.0, %v289
  %v291 = vpop.f32.mrf.mxu0
  %292 = vmatprep.mubr.f32.mxu0 0.0
  %293 = vmatmul.mubr.f32.gmra.mxu0 %v54
  %v294 = vpop.f32.mrf.mxu0
  %v295 = vadd.f32 0.0, %v294
  %v296 = vpop.f32.mrf.mxu0
  %297 = vmatprep.mubr.f32.mxu0 0.0
  %298 = vmatmul.mubr.f32.gmra.mxu0 %v57
  %v299 = vpop.f32.mrf.mxu0
  %v300 = vadd.f32 0.0, %v299
  %v301 = vpop.f32.mrf.mxu0
  %302 = vmatprep.mubr.f32.mxu0 0.0
  %303 = vmatmul.mubr.f32.gmra.mxu0 %v60
  %v304 = vpop.f32.mrf.mxu0
  %v305 = vadd.f32 0.0, %v304
  %v306 = vpop.f32.mrf.mxu0
  %307 = vdwg.mxu0
  %308 = vst.msk [vmem:[%s4] sm:$0xff] %vm177, %v260
  %309 = vst.msk [vmem:[%s4 + $0x8] sm:$0xff] %vm177, %v265
  %310 = vst.msk [vmem:[%s4 + $0x10] sm:$0xff] %vm177, %v270
  %311 = vst.msk [vmem:[%s4 + $0x18] sm:$0xff] %vm177, %v275
  %312 = vst.msk [vmem:[%s4 + $0x20] sm:$0xff] %vm177, %v280
  %313 = vst.msk [vmem:[%s4 + $0x28] sm:$0xff] %vm177, %v285
  %314 = vst.msk [vmem:[%s4 + $0x30] sm:$0xff] %vm177, %v290
  %315 = vst.msk [vmem:[%s4 + $0x38] sm:$0xff] %vm177, %v295
  %316 = vst.msk [vmem:[%s4 + $0x40] sm:$0xff] %vm177, %v300
  %317 = vst.msk [vmem:[%s4 + $0x48] sm:$0xff] %vm177, %v305
  // Predicated region
  $region14: #{tpu_custom_call.1} parent=0 // pred_check
    _
  $region15: #{tpu_custom_call.1} parent=0 // pred_check_branch
    %319 = sbr.rel (0) target = $region17
  $region16: #{tpu_custom_call.1} parent=0 // pred_region
    _
  $region17: #{tpu_custom_call.1} parent=0 // pred_fallthru
    _
  // Predicated region
  $region18: #{tpu_custom_call.1} parent=0 // pred_check
    _
  $region19: #{tpu_custom_call.1} parent=0 // pred_check_branch
    %321 = sbr.rel (0) target = $region21
  $region20: #{tpu_custom_call.1} parent=0 // pred_region
    _
  $region21: #{tpu_custom_call.1} parent=0 // pred_fallthru
    _
  // Predicated region
  $region22: #{tpu_custom_call.1} parent=0 // pred_check
    _
  $region23: #{tpu_custom_call.1} parent=0 // pred_check_branch
    %323 = sbr.rel (0) target = $region25
  $region24: #{tpu_custom_call.1} parent=0 // pred_region
    _
  $region25: #{tpu_custom_call.1} parent=0 // pred_fallthru
    _
  // Predicated region
  $region26: #{tpu_custom_call.1} parent=0 // pred_check
    _
  $region27: #{tpu_custom_call.1} parent=0 // pred_check_branch
    %325 = sbr.rel (0) target = $region29
  $region28: #{tpu_custom_call.1} parent=0 // pred_region
    _
  $region29: #{tpu_custom_call.1} parent=0 // pred_fallthru
    _

</llo_original>
